<compile_context>
chip_gen: v7x
topology: tpu7x:2x2x1
jax: 0.10.0
libtpu: 0.0.40
codegen_flags: <defaults>
</compile_context>

<pallas_src>
import functools

import jax
import jax.numpy as jnp
from jax.experimental import pallas as pl
from jax.experimental.pallas import tpu as pltpu

IGNORE_INDEX = -100


def _ce_kernel(logits_ref, labels_ref, psum_ref, pcnt_ref, acc_ref, cnt_ref,
               *, ignore_index, ragged, pix_block, pix_bound):
    n = pl.program_id(1)
    j = pl.program_id(2)

    @pl.when(jnp.logical_and(n == 0, j == 0))
    def _():
        acc_ref[...] = jnp.zeros_like(acc_ref)
        cnt_ref[...] = jnp.zeros_like(cnt_ref)

    logits = logits_ref[...].astype(jnp.float32)   # (bn, C, rows, 128) or (bn, C, T)
    labels = labels_ref[...].astype(jnp.int32)     # (bn, 1, rows, 128) or (bn, 1, T)

    # Numerically stable logsumexp over the class axis (axis=1).
    m = jnp.max(logits, axis=1, keepdims=True)
    lse = m + jnp.log(jnp.sum(jnp.exp(logits - m), axis=1, keepdims=True))

    # Gather the logit at the label index via one-hot compare along classes.
    class_ids = jax.lax.broadcasted_iota(jnp.int32, logits.shape, 1)
    picked = jnp.sum(jnp.where(class_ids == labels, logits, 0.0),
                     axis=1, keepdims=True)

    valid = labels != ignore_index
    if ragged:
        # Boundary tile only: mask pixels past the true extent.  Axis 2 holds
        # the tiled pixel (1-D layout) or row (2-D layout) index in both cases.
        pix = j * pix_block + jax.lax.broadcasted_iota(jnp.int32, labels.shape, 2)
        valid = jnp.logical_and(valid, pix < pix_bound)

    # where() (not *valid) so garbage lse/picked in padded lanes never leaks.
    acc_ref[...] += jnp.where(valid, lse - picked, 0.0)
    cnt_ref[...] += valid.astype(jnp.int32)

    @pl.when(jnp.logical_and(n == pl.num_programs(1) - 1,
                             j == pl.num_programs(2) - 1))
    def _():
        psum_ref[...] = jnp.sum(acc_ref[...]).reshape(1, 1, 1)
        pcnt_ref[...] = jnp.sum(cnt_ref[...]).reshape(1, 1, 1)


def cross_entropy_loss(pred, label, *, ignore_index=IGNORE_INDEX,
                       target_block_bytes=2 * 1024 * 1024,
                       max_tile_pixels=None):
    """pred: (N, C, H, W) float logits, label: (N, H, W) int -> scalar mean loss."""
    N, C, H, W = pred.shape
    HW = H * W
    itemsize = jnp.dtype(pred.dtype).itemsize

    # Megacore (v7x): split the batch into 2 per-core partials when it divides.
    nc = 2 if (N % 2 == 0 and N >= 2) else 1
    npc = N // nc

    two_d = (HW % 128 == 0)
    if two_d:
        # (rows, 128) pixel layout: dense sublane packing for per-pixel math.
        rows_total = HW // 128
        rows = (target_block_bytes // (C * 128 * itemsize)) // 8 * 8
        if max_tile_pixels is not None:
            rows = min(rows, (max_tile_pixels // 128) // 8 * 8)
        rows = max(8, rows)
        if rows >= rows_total:
            rows = rows_total
        num_tiles = pl.cdiv(rows_total, rows)
        ragged = (rows_total % rows) != 0
        pix_block, pix_bound = rows, rows_total
        pix_block_shape = (rows, 128)
        logits = pred.reshape(N, C, rows_total, 128)
        labels = label.astype(jnp.int32).reshape(N, 1, rows_total, 128)
    else:
        # Fallback 1-D pixel layout (HW not a multiple of 128).
        tile = (target_block_bytes // (C * itemsize)) // 128 * 128
        if max_tile_pixels is not None:
            tile = min(tile, (max_tile_pixels // 128) * 128)
        tile = max(128, tile)
        if tile >= HW:
            tile = HW
        num_tiles = pl.cdiv(HW, tile)
        ragged = (HW % tile) != 0
        pix_block, pix_bound = tile, HW
        pix_block_shape = (tile,)
        logits = pred.reshape(N, C, HW)
        labels = label.astype(jnp.int32).reshape(N, 1, HW)

    # Small-image / large-batch shapes: fold several images per grid step so a
    # single large contiguous DMA replaces many tiny per-image ones.
    per_image_bytes = C * itemsize
    for d in pix_block_shape:
        per_image_bytes *= d
    bn = 1
    if num_tiles == 1 and npc > 1:
        max_bn = max(1, target_block_bytes // max(per_image_bytes, 1))
        for d in range(min(max_bn, npc), 0, -1):
            if npc % d == 0:
                bn = d
                break
    nb = npc // bn   # batch blocks per core

    if two_d:
        in_map = lambda c, n, j: (c * nb + n, 0, j, 0)
    else:
        in_map = lambda c, n, j: (c * nb + n, 0, j)
    out_map = lambda c, n, j: (c, 0, 0)

    kernel = functools.partial(_ce_kernel, ignore_index=ignore_index,
                               ragged=ragged, pix_block=pix_block,
                               pix_bound=pix_bound)

    P = N * HW
    cost = pl.CostEstimate(
        flops=5 * P * C,
        transcendentals=P * (C + 1),
        bytes_accessed=P * C * itemsize + P * 4 + nc * 8,
    )

    psum, pcnt = pl.pallas_call(
        kernel,
        out_shape=(
            jax.ShapeDtypeStruct((nc, 1, 1), jnp.float32),
            jax.ShapeDtypeStruct((nc, 1, 1), jnp.int32),
        ),
        grid_spec=pltpu.PrefetchScalarGridSpec(
            num_scalar_prefetch=0,
            grid=(nc, nb, num_tiles),
            in_specs=[
                pl.BlockSpec((bn, C) + pix_block_shape, in_map),
                pl.BlockSpec((bn, 1) + pix_block_shape, in_map),
            ],
            out_specs=[
                pl.BlockSpec((1, 1, 1), out_map),
                pl.BlockSpec((1, 1, 1), out_map),
            ],
            scratch_shapes=[
                pltpu.VMEM((bn, 1) + pix_block_shape, jnp.float32),  # loss partials
                pltpu.VMEM((bn, 1) + pix_block_shape, jnp.int32),    # valid counts
            ],
        ),
        compiler_params=pltpu.CompilerParams(
            dimension_semantics=("parallel", "arbitrary", "arbitrary"),
            vmem_limit_bytes=32 * 1024 * 1024,
        ),
        cost_estimate=cost,
    )(logits, labels)

    # TODO(synk): optional per-class `weight` tensor and reduction='sum'/'none'
    # (module defaults are weight=None, reduction='mean').
    total = jnp.sum(psum)
    count = jnp.sum(pcnt).astype(jnp.float32)
    return total / count


def _reference(pred, label, ignore_index=IGNORE_INDEX):
    N, C, H, W = pred.shape
    logits = jnp.transpose(pred, (0, 2, 3, 1)).reshape(-1, C).astype(jnp.float32)
    labels = label.reshape(-1).astype(jnp.int32)
    lse = jax.scipy.special.logsumexp(logits, axis=-1)
    safe = jnp.where(labels == ignore_index, 0, labels)
    picked = jnp.take_along_axis(logits, safe[:, None], axis=-1)[:, 0]
    valid = (labels != ignore_index).astype(jnp.float32)
    return jnp.sum((lse - picked) * valid) / jnp.sum(valid)


if __name__ == "__main__":
    key = jax.random.PRNGKey(0)
    keys = jax.random.split(key, 8)

    # Case 1: canonical small shape; HW%128==0 -> (rows,128) layout, per-core
    # partials (nc=2), single pixel tile per image.
    N, C, H, W = 2, 4, 16, 16
    pred = jax.random.normal(keys[0], (N, C, H, W), dtype=jnp.float32)
    label = jax.random.randint(keys[1], (N, H, W), 0, C, dtype=jnp.int32)
    label = label.at[0, 0, :4].set(IGNORE_INDEX)
    loss = jax.block_until_ready(cross_entropy_loss(pred, label))
    ref = _reference(pred, label)
    assert jnp.allclose(loss, ref, rtol=1e-5, atol=1e-5), (loss, ref)

    # Case 2: HW not a multiple of 128 -> 1-D pixel fallback, full-extent tile.
    N2, C2, H2, W2 = 2, 21, 15, 20
    pred2 = jax.random.normal(keys[2], (N2, C2, H2, W2), dtype=jnp.float32)
    label2 = jax.random.randint(keys[3], (N2, H2, W2), 0, C2, dtype=jnp.int32)
    label2 = label2.at[1, :2, :].set(IGNORE_INDEX)
    loss2 = jax.block_until_ready(cross_entropy_loss(pred2, label2))
    ref2 = _reference(pred2, label2)
    assert jnp.allclose(loss2, ref2, rtol=1e-5, atol=1e-5), (loss2, ref2)

    # Case 2b: same inputs with a tiny forced tile -> ragged 1-D boundary mask.
    loss2b = jax.block_until_ready(
        cross_entropy_loss(pred2, label2, max_tile_pixels=128))
    assert jnp.allclose(loss2b, ref2, rtol=1e-5, atol=1e-5), (loss2b, ref2)

    # Case 3: odd batch (nc=1), (rows,128) layout with a ragged row tile
    # (rows_total=10, tile rows=8).
    N3, C3, H3, W3 = 3, 6, 32, 40
    pred3 = jax.random.normal(keys[4], (N3, C3, H3, W3), dtype=jnp.float32)
    label3 = jax.random.randint(keys[5], (N3, H3, W3), 0, C3, dtype=jnp.int32)
    label3 = label3.at[2, 5, :].set(IGNORE_INDEX)
    loss3 = jax.block_until_ready(
        cross_entropy_loss(pred3, label3, max_tile_pixels=1024))
    ref3 = _reference(pred3, label3)
    assert jnp.allclose(loss3, ref3, rtol=1e-5, atol=1e-5), (loss3, ref3)

    # Case 4: larger batch of small images -> multi-image blocks (bn=2).
    N4, C4, H4, W4 = 4, 4, 16, 16
    pred4 = jax.random.normal(keys[6], (N4, C4, H4, W4), dtype=jnp.float32)
    label4 = jax.random.randint(keys[7], (N4, H4, W4), 0, C4, dtype=jnp.int32)
    loss4 = jax.block_until_ready(cross_entropy_loss(pred4, label4))
    ref4 = _reference(pred4, label4)
    assert jnp.allclose(loss4, ref4, rtol=1e-5, atol=1e-5), (loss4, ref4)

    print("KERNEL_OK")
</pallas_src>

<mosaic_0001>
module attributes {stable_mosaic.version = 11 : i64} {
  func.func @_ce_kernel(%arg0: i32, %arg1: i32, %arg2: i32, %arg3: memref<1x4x2x128xf32, #tpu.memory_space<vmem>>, %arg4: memref<1x1x2x128xi32, #tpu.memory_space<vmem>>, %arg5: memref<1x1x1xf32, #tpu.memory_space<vmem>>, %arg6: memref<1x1x1xi32, #tpu.memory_space<vmem>>, %arg7: memref<1x1x2x128xf32, #tpu.memory_space<vmem>>, %arg8: memref<1x1x2x128xi32, #tpu.memory_space<vmem>>) attributes {dimension_semantics = [#tpu.dimension_semantics<parallel>, #tpu.dimension_semantics<arbitrary>, #tpu.dimension_semantics<arbitrary>], iteration_bounds = array<i64: 2, 1, 1>, scalar_prefetch = 0 : i64, scratch_operands = 2 : i64, tpu.core_type = #tpu.core_type<tc>, window_params = [{transform_indices = @transform_0, window_bounds = array<i64: 1, 4, 2, 128>}, {transform_indices = @transform_1, window_bounds = array<i64: 1, 1, 2, 128>}, {transform_indices = @transform_2, window_bounds = array<i64: 1, 1, 1>}, {transform_indices = @transform_3, window_bounds = array<i64: 1, 1, 1>}]} {
    %c0_i32 = arith.constant 0 : i32
    %0 = arith.cmpi eq, %arg1, %c0_i32 : i32
    %c0_i32_0 = arith.constant 0 : i32
    %1 = arith.cmpi eq, %arg2, %c0_i32_0 : i32
    %2 = arith.andi %0, %1 : i1
    %3 = arith.extui %2 : i1 to i32
    %c0_i32_1 = arith.constant 0 : i32
    %4 = arith.cmpi ne, %3, %c0_i32_1 : i32
    scf.if %4 {
      %cst_32 = arith.constant 0.000000e+00 : f32
      %40 = vector.broadcast %cst_32 : f32 to vector<1x1x2x128xf32>
      %c0_33 = arith.constant 0 : index
      %c0_34 = arith.constant 0 : index
      %c0_35 = arith.constant 0 : index
      %c0_36 = arith.constant 0 : index
      %41 = vector.load %arg7[%c0_33, %c0_34, %c0_35, %c0_36] : memref<1x1x2x128xf32, #tpu.memory_space<vmem>>, vector<1x1x2x128xf32>
      tpu.vector_store %arg7[%c0_33, %c0_34, %c0_35, %c0_36], %40 {strides = array<i32>} : memref<1x1x2x128xf32, #tpu.memory_space<vmem>>, vector<1x1x2x128xf32>,
      %c0_i32_37 = arith.constant 0 : i32
      %42 = vector.broadcast %c0_i32_37 : i32 to vector<1x1x2x128xi32>
      %c0_38 = arith.constant 0 : index
      %c0_39 = arith.constant 0 : index
      %c0_40 = arith.constant 0 : index
      %c0_41 = arith.constant 0 : index
      %43 = vector.load %arg8[%c0_38, %c0_39, %c0_40, %c0_41] : memref<1x1x2x128xi32, #tpu.memory_space<vmem>>, vector<1x1x2x128xi32>
      tpu.vector_store %arg8[%c0_38, %c0_39, %c0_40, %c0_41], %42 {strides = array<i32>} : memref<1x1x2x128xi32, #tpu.memory_space<vmem>>, vector<1x1x2x128xi32>,
    } else {
    }
    %c0 = arith.constant 0 : index
    %c0_2 = arith.constant 0 : index
    %c0_3 = arith.constant 0 : index
    %c0_4 = arith.constant 0 : index
    %5 = vector.load %arg3[%c0, %c0_2, %c0_3, %c0_4] : memref<1x4x2x128xf32, #tpu.memory_space<vmem>>, vector<1x4x2x128xf32>
    %c0_5 = arith.constant 0 : index
    %c0_6 = arith.constant 0 : index
    %c0_7 = arith.constant 0 : index
    %c0_8 = arith.constant 0 : index
    %6 = vector.load %arg4[%c0_5, %c0_6, %c0_7, %c0_8] : memref<1x1x2x128xi32, #tpu.memory_space<vmem>>, vector<1x1x2x128xi32>
    %cst = arith.constant dense<0xFF800000> : vector<1x2x128xf32>
    %7 = vector.multi_reduction <maximumf>, %5, %cst [1] : vector<1x4x2x128xf32> to vector<1x2x128xf32>
    %8 = vector.shape_cast %7 : vector<1x2x128xf32> to vector<1x1x2x128xf32>
    %9 = vector.broadcast %8 : vector<1x1x2x128xf32> to vector<1x4x2x128xf32>
    %10 = arith.subf %5, %9 : vector<1x4x2x128xf32>
    %11 = math.exp %10 : vector<1x4x2x128xf32>
    %cst_9 = arith.constant dense<0.000000e+00> : vector<1x2x128xf32>
    %12 = vector.multi_reduction <add>, %11, %cst_9 [1] : vector<1x4x2x128xf32> to vector<1x2x128xf32>
    %13 = vector.shape_cast %12 : vector<1x2x128xf32> to vector<1x1x2x128xf32>
    %14 = math.log %13 : vector<1x1x2x128xf32>
    %15 = arith.addf %8, %14 : vector<1x1x2x128xf32>
    %16 = tpu.iota {dimensions = array<i32: 1>} : vector<1x4x2x128xi32>
    %17 = vector.broadcast %6 : vector<1x1x2x128xi32> to vector<1x4x2x128xi32>
    %18 = arith.cmpi eq, %16, %17 : vector<1x4x2x128xi32>
    %cst_10 = arith.constant 0.000000e+00 : f32
    %19 = vector.broadcast %cst_10 : f32 to vector<1x4x2x128xf32>
    %20 = arith.select %18, %5, %19 : vector<1x4x2x128xi1>, vector<1x4x2x128xf32>
    %cst_11 = arith.constant dense<0.000000e+00> : vector<1x2x128xf32>
    %21 = vector.multi_reduction <add>, %20, %cst_11 [1] : vector<1x4x2x128xf32> to vector<1x2x128xf32>
    %22 = vector.shape_cast %21 : vector<1x2x128xf32> to vector<1x1x2x128xf32>
    %c-100_i32 = arith.constant -100 : i32
    %23 = vector.broadcast %c-100_i32 : i32 to vector<1x1x2x128xi32>
    %24 = arith.cmpi ne, %6, %23 : vector<1x1x2x128xi32>
    %c0_12 = arith.constant 0 : index
    %c0_13 = arith.constant 0 : index
    %c0_14 = arith.constant 0 : index
    %c0_15 = arith.constant 0 : index
    %25 = vector.load %arg7[%c0_12, %c0_13, %c0_14, %c0_15] : memref<1x1x2x128xf32, #tpu.memory_space<vmem>>, vector<1x1x2x128xf32>
    %26 = arith.subf %15, %22 : vector<1x1x2x128xf32>
    %cst_16 = arith.constant 0.000000e+00 : f32
    %27 = vector.broadcast %cst_16 : f32 to vector<1x1x2x128xf32>
    %28 = arith.select %24, %26, %27 : vector<1x1x2x128xi1>, vector<1x1x2x128xf32>
    %29 = arith.addf %25, %28 : vector<1x1x2x128xf32>
    %c0_17 = arith.constant 0 : index
    %c0_18 = arith.constant 0 : index
    %c0_19 = arith.constant 0 : index
    %c0_20 = arith.constant 0 : index
    %30 = vector.load %arg7[%c0_17, %c0_18, %c0_19, %c0_20] : memref<1x1x2x128xf32, #tpu.memory_space<vmem>>, vector<1x1x2x128xf32>
    tpu.vector_store %arg7[%c0_17, %c0_18, %c0_19, %c0_20], %29 {strides = array<i32>} : memref<1x1x2x128xf32, #tpu.memory_space<vmem>>, vector<1x1x2x128xf32>,
    %c0_21 = arith.constant 0 : index
    %c0_22 = arith.constant 0 : index
    %c0_23 = arith.constant 0 : index
    %c0_24 = arith.constant 0 : index
    %31 = vector.load %arg8[%c0_21, %c0_22, %c0_23, %c0_24] : memref<1x1x2x128xi32, #tpu.memory_space<vmem>>, vector<1x1x2x128xi32>
    %32 = arith.extui %24 : vector<1x1x2x128xi1> to vector<1x1x2x128xi32>
    %33 = arith.addi %31, %32 : vector<1x1x2x128xi32>
    %c0_25 = arith.constant 0 : index
    %c0_26 = arith.constant 0 : index
    %c0_27 = arith.constant 0 : index
    %c0_28 = arith.constant 0 : index
    %34 = vector.load %arg8[%c0_25, %c0_26, %c0_27, %c0_28] : memref<1x1x2x128xi32, #tpu.memory_space<vmem>>, vector<1x1x2x128xi32>
    tpu.vector_store %arg8[%c0_25, %c0_26, %c0_27, %c0_28], %33 {strides = array<i32>} : memref<1x1x2x128xi32, #tpu.memory_space<vmem>>, vector<1x1x2x128xi32>,
    %c0_i32_29 = arith.constant 0 : i32
    %35 = arith.cmpi eq, %arg1, %c0_i32_29 : i32
    %c0_i32_30 = arith.constant 0 : i32
    %36 = arith.cmpi eq, %arg2, %c0_i32_30 : i32
    %37 = arith.andi %35, %36 : i1
    %38 = arith.extui %37 : i1 to i32
    %c0_i32_31 = arith.constant 0 : i32
    %39 = arith.cmpi ne, %38, %c0_i32_31 : i32
    scf.if %39 {
      %c0_32 = arith.constant 0 : index
      %c0_33 = arith.constant 0 : index
      %c0_34 = arith.constant 0 : index
      %c0_35 = arith.constant 0 : index
      %40 = vector.load %arg7[%c0_32, %c0_33, %c0_34, %c0_35] : memref<1x1x2x128xf32, #tpu.memory_space<vmem>>, vector<1x1x2x128xf32>
      %41 = vector.shape_cast %40 : vector<1x1x2x128xf32> to vector<1x1x1x2x128xf32>
      %cst_36 = arith.constant dense<0.000000e+00> : vector<1xf32>
      %42 = vector.multi_reduction <add>, %41, %cst_36 [1, 2, 3, 4] : vector<1x1x1x2x128xf32> to vector<1xf32>
      %43 = vector.shape_cast %42 : vector<1xf32> to vector<1x1x1x1x1xf32>
      %44 = vector.extract %43[0, 0, 0, 0, 0] : f32 from vector<1x1x1x1x1xf32>
      %45 = vector.broadcast %44 : f32 to vector<1x1x1xf32>
      %c0_37 = arith.constant 0 : index
      %c0_38 = arith.constant 0 : index
      %c0_39 = arith.constant 0 : index
      %46 = vector.load %arg5[%c0_37, %c0_38, %c0_39] : memref<1x1x1xf32, #tpu.memory_space<vmem>>, vector<1x1x1xf32>
      tpu.vector_store %arg5[%c0_37, %c0_38, %c0_39], %45 {strides = array<i32>} : memref<1x1x1xf32, #tpu.memory_space<vmem>>, vector<1x1x1xf32>,
      %c0_40 = arith.constant 0 : index
      %c0_41 = arith.constant 0 : index
      %c0_42 = arith.constant 0 : index
      %c0_43 = arith.constant 0 : index
      %47 = vector.load %arg8[%c0_40, %c0_41, %c0_42, %c0_43] : memref<1x1x2x128xi32, #tpu.memory_space<vmem>>, vector<1x1x2x128xi32>
      %48 = vector.shape_cast %47 : vector<1x1x2x128xi32> to vector<1x1x1x2x128xi32>
      %cst_44 = arith.constant dense<0> : vector<1xi32>
      %49 = vector.multi_reduction <add>, %48, %cst_44 [1, 2, 3, 4] : vector<1x1x1x2x128xi32> to vector<1xi32>
      %50 = vector.shape_cast %49 : vector<1xi32> to vector<1x1x1x1x1xi32>
      %51 = vector.extract %50[0, 0, 0, 0, 0] : i32 from vector<1x1x1x1x1xi32>
      %52 = vector.broadcast %51 : i32 to vector<1x1x1xi32>
      %c0_45 = arith.constant 0 : index
      %c0_46 = arith.constant 0 : index
      %c0_47 = arith.constant 0 : index
      %53 = vector.load %arg6[%c0_45, %c0_46, %c0_47] : memref<1x1x1xi32, #tpu.memory_space<vmem>>, vector<1x1x1xi32>
      tpu.vector_store %arg6[%c0_45, %c0_46, %c0_47], %52 {strides = array<i32>} : memref<1x1x1xi32, #tpu.memory_space<vmem>>, vector<1x1x1xi32>,
    } else {
    }
    return
  }
  func.func @transform_0(%arg0: i32, %arg1: i32, %arg2: i32) -> (i32, i32, i32, i32) {
    %c1_i32 = arith.constant 1 : i32
    %0 = arith.muli %arg0, %c1_i32 : i32
    %1 = arith.addi %0, %arg1 : i32
    %c0_i32 = arith.constant 0 : i32
    %c0_i32_0 = arith.constant 0 : i32
    %c0_i32_1 = arith.constant 0 : i32
    return %1, %c0_i32, %arg2, %c0_i32_0 : i32, i32, i32, i32
  }
  func.func @transform_1(%arg0: i32, %arg1: i32, %arg2: i32) -> (i32, i32, i32, i32) {
    %c1_i32 = arith.constant 1 : i32
    %0 = arith.muli %arg0, %c1_i32 : i32
    %1 = arith.addi %0, %arg1 : i32
    %c0_i32 = arith.constant 0 : i32
    %c0_i32_0 = arith.constant 0 : i32
    %c0_i32_1 = arith.constant 0 : i32
    return %1, %c0_i32, %arg2, %c0_i32_0 : i32, i32, i32, i32
  }
  func.func @transform_2(%arg0: i32, %arg1: i32, %arg2: i32) -> (i32, i32, i32) {
    %c0_i32 = arith.constant 0 : i32
    %c0_i32_0 = arith.constant 0 : i32
    %c0_i32_1 = arith.constant 0 : i32
    return %arg0, %c0_i32, %c0_i32_0 : i32, i32, i32
  }
  func.func @transform_3(%arg0: i32, %arg1: i32, %arg2: i32) -> (i32, i32, i32) {
    %c0_i32 = arith.constant 0 : i32
    %c0_i32_0 = arith.constant 0 : i32
    %c0_i32_1 = arith.constant 0 : i32
    return %arg0, %c0_i32, %c0_i32_0 : i32, i32, i32
  }
}

</mosaic_0001>

<llo_original>
// kernel: tpu_custom_call.1
$region0: #{tpu_custom_call.1}
  #allocation0 [shape = 'u32[]', space=smem, size = 0x4, offset = 0x4, fixed_abs, tag = 'smem constant byte address 0x4 - core index']
  #allocation1 [shape = 'u32[144,128]{1,0:T(1,128)}', space=vmem, size = 0x12000, scoped, tag = 'internal scratch']
  #allocation2 [shape = 'f32[1,1,2,128]{3,2,1,0:T(2,128)}', space=vmem, size = 0x400, scoped, tag = 'scratch operand']
  #allocation3 [shape = 's32[1,1,2,128]{3,2,1,0:T(2,128)}', space=vmem, size = 0x400, scoped, tag = 'scratch operand']
  %s0 = inlined_call_operand.hbm [shape: f32[2,4,2,128], index: 0, kind: input, shape index: {}]
  %s1 = inlined_call_operand.hbm [shape: s32[2,1,2,128], index: 1, kind: input, shape index: {}]
  %s2 = inlined_call_operand.vmem [shape: f32[2,1,1], index: 2, kind: output, shape index: {0}]
  %s3 = inlined_call_operand.vmem [shape: s32[2,1,1], index: 3, kind: output, shape index: {1}]
  %4 = xla_tuple %s2, %s3
  %s5 = sld [smem:[#allocation0]]
  $region65: #{tpu_custom_call.1} parent=0
    _
  %s7 = ssub.s32 1, %s5
  %s8 = scalar_select 0, %s7, %s5
  $region1: #{tpu_custom_call.1} parent=0
    #allocation4 [shape = 'u8[8192]{0}', space=vmem, size = 0x2000, scoped, tag = 'input window, operand 0']
    #allocation5 [shape = 's32[2]{0}', space=sflag, size = 0x8, scoped, tag = 'scoped memory for tpu_custom_call.1']
    #allocation6 [shape = 'u8[2048]{0}', space=vmem, size = 0x800, scoped, tag = 'input window, operand 1']
    #allocation7 [shape = 's32[2]{0}', space=sflag, size = 0x8, scoped, tag = 'scoped memory for tpu_custom_call.1']
    %9 = vsyncpa [#allocation5], 0
    %s10 = scalar_lea.sflag [#allocation5], 1
    %11 = vsyncpa %s10, 0
    %12 = vsyncpa [#allocation7], 0
    %s13 = scalar_lea.sflag [#allocation7], 1
    %14 = vsyncpa %s13, 0
    loop: start=0, step=1, limit=4
    $region2: #{tpu_custom_call.1} parent=1 // loop_pre_header
      _
    $region3: #{tpu_custom_call.1} parent=1 // loop_header
      %s16 = sphi 0, %s20
      %p17 = scmp.ge.s32.totalorder %s16, 4
      %s23 = sphi 0, %s42
      %s24 = sphi 0, %s38
      %s25 = sphi 0, %s34
      %s26 = sphi 0, %s23
      %s27 = sphi 0, %s24
      %s28 = sphi 0, %s25
      %s29 = sphi 0, %s26
      %s30 = sphi 0, %s27
      %s31 = sphi 0, %s28
      %s49 = sphi 0, %s51
      %s52 = sphi 0, %s49
      %s53 = sphi 0, %s52
      %s69 = sphi 0, %s53
      %s79 = sphi 0, %s81
      %s82 = sphi 0, %s79
      %s83 = sphi 0, %s82
      %s99 = sphi 0, %s83
      %s105 = sphi 0, %s107
      %s108 = sphi 0, %s105
      %s109 = sphi 0, %s108
      %s125 = sphi 0, %s109
      %s131 = sphi 0, %s133
      %s134 = sphi 0, %s131
      %s135 = sphi 0, %s134
      %s151 = sphi 0, %s135
    $region4: #{tpu_custom_call.1} parent=1 // loop_header_branch
      %19 = sbr.rel (%p17) target = $region8
    $region5: #{tpu_custom_call.1} parent=1 // loop_body
      %s21 = ssub.s32 %s16, 1
      %s22 = ssub.s32 %s16, 2
      %s32 = sadd.s32 1, %s25
      %p33 = scmp.ge.s32.totalorder %s32, 1
      %s34 = scalar_select %p33, 0, %s32
      %s35 = sadd.s32 1, %s24
      %s36 = scalar_select %p33, %s35, %s24
      %p37 = scmp.ge.s32.totalorder %s36, 1
      %s38 = scalar_select %p37, 0, %s36
      %s39 = sadd.s32 1, %s23
      %s40 = scalar_select %p37, %s39, %s23
      %p41 = scmp.ge.s32.totalorder %s40, 2
      %s42 = scalar_select %p41, 0, %s40
      %s43 = sadd.s32 %s23, %s24
      %s44 = sadd.s32 %s42, %s38
      %s45 = ssub.s32 %s43, %s44
      %s46 = ssub.s32 %s25, %s34
      %s47 = sor.u32 %s45, %s46
      %p48 = scmp.eq.s32.totalorder %s47, 0
      %s50 = sadd.s32 %s49, 1
      %s51 = scalar_select %p48, %s49, %s50
      %p54 = pneg %p48
      %p55 = scmp.eq.s32.totalorder %s16, 1
      %p56 = por %p54, %p55
      %p57 = scmp.ne.s32.totalorder %s49, %s52
      %p58 = scmp.eq.s32.totalorder %s16, 0
      %p59 = por %p57, %p58
      %p60 = scmp.ne.s32.totalorder %s49, %s52
      %p61 = scmp.eq.s32.totalorder %s21, 1
      %p62 = por %p60, %p61
      %p63 = scmp.ne.s32.totalorder %s52, %s53
      %p64 = scmp.eq.s32.totalorder %s21, 0
      %p65 = por %p63, %p64
      %p66 = scmp.ne.s32.totalorder %s52, %s53
      %p67 = scmp.eq.s32.totalorder %s22, 1
      %p68 = por %p66, %p67
      %p70 = scmp.ne.s32.totalorder %s53, %s69
      %p71 = scmp.eq.s32.totalorder %s22, 0
      %p72 = por %p70, %p71
      %s73 = sadd.s32 %s23, %s24
      %s74 = sadd.s32 %s42, %s38
      %s75 = ssub.s32 %s73, %s74
      %s76 = ssub.s32 %s25, %s34
      %s77 = sor.u32 %s75, %s76
      %p78 = scmp.eq.s32.totalorder %s77, 0
      %s80 = sadd.s32 %s79, 1
      %s81 = scalar_select %p78, %s79, %s80
      %p84 = pneg %p78
      %p85 = scmp.eq.s32.totalorder %s16, 1
      %p86 = por %p84, %p85
      %p87 = scmp.ne.s32.totalorder %s79, %s82
      %p88 = scmp.eq.s32.totalorder %s16, 0
      %p89 = por %p87, %p88
      %p90 = scmp.ne.s32.totalorder %s79, %s82
      %p91 = scmp.eq.s32.totalorder %s21, 1
      %p92 = por %p90, %p91
      %p93 = scmp.ne.s32.totalorder %s82, %s83
      %p94 = scmp.eq.s32.totalorder %s21, 0
      %p95 = por %p93, %p94
      %p96 = scmp.ne.s32.totalorder %s82, %s83
      %p97 = scmp.eq.s32.totalorder %s22, 1
      %p98 = por %p96, %p97
      %p100 = scmp.ne.s32.totalorder %s83, %s99
      %p101 = scmp.eq.s32.totalorder %s22, 0
      %p102 = por %p100, %p101
      %s103 = ssub.s32 %s23, %s42
      %p104 = scmp.eq.s32.totalorder %s103, 0
      %s106 = sadd.s32 %s105, 1
      %s107 = scalar_select %p104, %s105, %s106
      %p110 = pneg %p104
      %p111 = scmp.eq.s32.totalorder %s16, 1
      %p112 = por %p110, %p111
      %p113 = scmp.ne.s32.totalorder %s105, %s108
      %p114 = scmp.eq.s32.totalorder %s16, 0
      %p115 = por %p113, %p114
      %p116 = scmp.ne.s32.totalorder %s105, %s108
      %p117 = scmp.eq.s32.totalorder %s21, 1
      %p118 = por %p116, %p117
      %p119 = scmp.ne.s32.totalorder %s108, %s109
      %p120 = scmp.eq.s32.totalorder %s21, 0
      %p121 = por %p119, %p120
      %p122 = scmp.ne.s32.totalorder %s108, %s109
      %p123 = scmp.eq.s32.totalorder %s22, 1
      %p124 = por %p122, %p123
      %p126 = scmp.ne.s32.totalorder %s109, %s125
      %p127 = scmp.eq.s32.totalorder %s22, 0
      %p128 = por %p126, %p127
      %s129 = ssub.s32 %s23, %s42
      %p130 = scmp.eq.s32.totalorder %s129, 0
      %s132 = sadd.s32 %s131, 1
      %s133 = scalar_select %p130, %s131, %s132
      %p136 = pneg %p130
      %p137 = scmp.eq.s32.totalorder %s16, 1
      %p138 = por %p136, %p137
      %p139 = scmp.ne.s32.totalorder %s131, %s134
      %p140 = scmp.eq.s32.totalorder %s16, 0
      %p141 = por %p139, %p140
      %p142 = scmp.ne.s32.totalorder %s131, %s134
      %p143 = scmp.eq.s32.totalorder %s21, 1
      %p144 = por %p142, %p143
      %p145 = scmp.ne.s32.totalorder %s134, %s135
      %p146 = scmp.eq.s32.totalorder %s21, 0
      %p147 = por %p145, %p146
      %p148 = scmp.ne.s32.totalorder %s134, %s135
      %p149 = scmp.eq.s32.totalorder %s22, 1
      %p150 = por %p148, %p149
      %p152 = scmp.ne.s32.totalorder %s135, %s151
      %p153 = scmp.eq.s32.totalorder %s22, 0
      %p154 = por %p152, %p153
      %p155 = scmp.le.s32.totalorder 1, %s16
      %p156 = scmp.lt.s32.totalorder %s16, 3
      %p157 = pnand %p155, %p156
      %p158 = pneg %p157
      // Predicated region
      $region9: #{tpu_custom_call.1} parent=5 // pred_check
        _
      $region10: #{tpu_custom_call.1} parent=5 // pred_check_branch
        %160 = sbr.rel (%p157) target = $region12
      $region11: #{tpu_custom_call.1} parent=5 // pred_region
        %s161 = ssub.s32 %s16, 1
      $region12: #{tpu_custom_call.1} parent=5 // pred_fallthru
        _
      %p162 = scmp.lt.s32.totalorder %s16, 2
      // Predicated region
      $region13: #{tpu_custom_call.1} parent=5 // pred_check
        %p163 = pneg %p162
      $region14: #{tpu_custom_call.1} parent=5 // pred_check_branch
        %165 = sbr.rel (%p163) target = $region16
      $region15: #{tpu_custom_call.1} parent=5 // pred_region
        // Predicated region
        $region17: #{tpu_custom_call.1} parent=15 // pred_check
          %p166 = pneg %p59
        $region18: #{tpu_custom_call.1} parent=15 // pred_check_branch
          %168 = sbr.rel (%p166) target = $region20
        $region19: #{tpu_custom_call.1} parent=15 // pred_region
          %s169 = sand.u32 %s49, 1
          %s170 = scalar_lea.sflag [#allocation5], %s169
          %s171 = sand.u32 %s49, 1
          %s172 = smul.addr %s171, 8
          %s173 = scalar_lea.vmem [#allocation4], %s172
          %s174 = sadd.s32 %s23, %s24
          %s176 = ssub.s32 128, 128
          %177 = vsyncadd %s170, %s176
          %s178 = smul.addr %s174, 4
          %s179 = sadd.s32 %s25, %s178
          %s180 = smul.addr %s179, 32
          %s181 = scalar_lea.hbm %s0, %s180
          %s182 = sshll.u32 %s173, 4
          %s183 = int_to_ptr.vmem [resolvable:$true] %s182
          %188 = dma.hbm_to_vmem [thread:$0]  %s181, 128, %s183, %s170, 32, 32, 2
        $region20: #{tpu_custom_call.1} parent=15 // pred_fallthru
          _
        // Predicated region
        $region21: #{tpu_custom_call.1} parent=15 // pred_check
          %p189 = pneg %p89
        $region22: #{tpu_custom_call.1} parent=15 // pred_check_branch
          %191 = sbr.rel (%p189) target = $region24
        $region23: #{tpu_custom_call.1} parent=15 // pred_region
          %s192 = sand.u32 %s79, 1
          %s193 = scalar_lea.sflag [#allocation7], %s192
          %s194 = sand.u32 %s79, 1
          %s195 = smul.addr %s194, 2
          %s196 = scalar_lea.vmem [#allocation6], %s195
          %s197 = sadd.s32 %s23, %s24
          %s199 = ssub.s32 32, 32
          %200 = vsyncadd %s193, %s199
          %s201 = sadd.s32 %s25, %s197
          %s202 = smul.addr %s201, 32
          %s203 = scalar_lea.hbm %s1, %s202
          %s205 = sshll.u32 %s196, 4
          %s206 = int_to_ptr.vmem [resolvable:$true] %s205
          %208 = dma.hbm_to_vmem [thread:$0]  %s203, 32, %s206, %s193
        $region24: #{tpu_custom_call.1} parent=15 // pred_fallthru
          _
      $region16: #{tpu_custom_call.1} parent=5 // pred_fallthru
        _
      %p209 = scmp.le.s32.totalorder 1, %s16
      %p210 = scmp.lt.s32.totalorder %s16, 3
      %p211 = pnand %p209, %p210
      %p212 = pneg %p211
      // Predicated region
      $region25: #{tpu_custom_call.1} parent=5 // pred_check
        _
      $region26: #{tpu_custom_call.1} parent=5 // pred_check_branch
        %214 = sbr.rel (%p211) target = $region28
      $region27: #{tpu_custom_call.1} parent=5 // pred_region
        %s215 = ssub.s32 %s16, 1
        %s216 = sand.u32 %s52, 1
        %s217 = scalar_lea.sflag [#allocation5], %s216
        %s218 = sand.u32 %s52, 1
        %s219 = smul.addr %s218, 8
        %s220 = scalar_lea.vmem [#allocation4], %s219
        // Predicated region
        $region29: #{tpu_custom_call.1} parent=27 // pred_check
          %p221 = pneg %p65
        $region30: #{tpu_custom_call.1} parent=27 // pred_check_branch
          %223 = sbr.rel (%p221) target = $region32
        $region31: #{tpu_custom_call.1} parent=27 // pred_region
          %224 = dma.done %s217, 128
        $region32: #{tpu_custom_call.1} parent=27 // pred_fallthru
          _
        %s225 = sand.u32 %s82, 1
        %s226 = scalar_lea.sflag [#allocation7], %s225
        %s227 = sand.u32 %s82, 1
        %s228 = smul.addr %s227, 2
        %s229 = scalar_lea.vmem [#allocation6], %s228
        // Predicated region
        $region33: #{tpu_custom_call.1} parent=27 // pred_check
          %p230 = pneg %p95
        $region34: #{tpu_custom_call.1} parent=27 // pred_check_branch
          %232 = sbr.rel (%p230) target = $region36
        $region35: #{tpu_custom_call.1} parent=27 // pred_region
          %233 = dma.done %s226, 32
        $region36: #{tpu_custom_call.1} parent=27 // pred_fallthru
          _
        %s234 = sand.u32 %s52, 1
        %s235 = scalar_lea.sflag [#allocation5], %s234
        %s236 = sand.u32 %s52, 1
        %s237 = smul.addr %s236, 8
        %s238 = scalar_lea.vmem [#allocation4], %s237
        %p239 = pneg %p65
        %p240 = pneg %p62
        %s241 = sand.u32 %s82, 1
        %s242 = scalar_lea.sflag [#allocation7], %s241
        %s243 = sand.u32 %s82, 1
        %s244 = smul.addr %s243, 2
        %s245 = scalar_lea.vmem [#allocation6], %s244
        %p246 = pneg %p95
        %p247 = pneg %p92
        %p248 = pneg %p121
        %p249 = pneg %p118
        %p250 = scmp.lt.s32.totalorder %s26, 1
        %s251 = scalar_select %p250, %s26, 1
        %s252 = scalar_lea.vmem %s2, %s251
        %p253 = pneg %p147
        %p254 = pneg %p144
        %p255 = scmp.lt.s32.totalorder %s26, 1
        %s256 = scalar_select %p255, %s26, 1
        %s257 = scalar_lea.vmem %s3, %s256
        %s258 = sadd.s32 %s26, %s27
        %s259 = sadd.s32 %s26, %s27
        %p260 = scmp.lt.s32.totalorder %s26, 1
        %s261 = scalar_select %p260, %s26, 1
        %s262 = scalar_lea.vmem %s2, %s261
        %p263 = scmp.lt.s32.totalorder %s26, 1
        %s264 = scalar_select %p263, %s26, 1
        %s265 = scalar_lea.vmem %s3, %s264
        %p266 = scmp.eq.s32.totalorder %s27, 0
        %p267 = scmp.eq.s32.totalorder %s28, 0
        %p268 = pnand %p266, %p267
        %p269 = pneg %p268
        // Predicated region
        $region37: #{tpu_custom_call.1} parent=27 // pred_check
          _
        $region38: #{tpu_custom_call.1} parent=27 // pred_check_branch
          %271 = sbr.rel (%p268) target = $region40
        $region39: #{tpu_custom_call.1} parent=27 // pred_region
          %272 = vst [vmem:[#allocation2] sm:$0x3] 0.0
          %273 = vst [vmem:[#allocation3] sm:$0x3] 0
        $region40: #{tpu_custom_call.1} parent=27 // pred_fallthru
          _
        %v274 = vld [vmem:[%s220] sm:$0x3]
        %v275 = vld [vmem:[%s220 + $0x2] sm:$0x3]
        %v276 = vld [vmem:[%s220 + $0x4] sm:$0x3]
        %v277 = vld [vmem:[%s220 + $0x6] sm:$0x3]
        %v278 = vld [vmem:[%s229] sm:$0x3]
        %vm279 = vcmask 1041408
        %v280 = vsel %vm279, %v274, -inf
        %v281 = vsel %vm279, %v275, -inf
        %v282 = vsel %vm279, %v276, -inf
        %v283 = vsel %vm279, %v277, -inf
        %v284 = vmax.f32 %v280, %v281
        %v285 = vmax.f32 %v282, %v283
        %v286 = vmax.f32 %v284, %v285
        %v287 = vsub.f32 %v274, %v286
        %v288 = vsub.f32 %v275, %v286
        %v289 = vsub.f32 %v276, %v286
        %v290 = vsub.f32 %v277, %v286
        %v291 = vmul.f32 %v287, 1.442695
        %v292 = vpow.pop %v291
        %v293 = vmul.f32 %v288, 1.442695
        %v294 = vpow.pop %v293
        %v295 = vmul.f32 %v289, 1.442695
        %v296 = vpow.pop %v295
        %v297 = vmul.f32 %v290, 1.442695
        %v298 = vpow.pop %v297
        %v299 = vsel %vm279, %v292, 0.0
        %v300 = vsel %vm279, %v294, 0.0
        %v301 = vadd.f32 %v299, %v300
        %v302 = vsel %vm279, %v296, 0.0
        %v303 = vadd.f32 %v301, %v302
        %v304 = vsel %vm279, %v298, 0.0
        %v305 = vadd.f32 %v303, %v304
        %v306 = vlog2.pop %v305
        %v307 = vmul.f32 %v306, 0.6931472
        %v308 = vadd.f32 %v286, %v307
        %vm309 = vcmp.eq.s32.totalorder %v278, 0
        %vm310 = vcmp.eq.s32.totalorder %v278, 1
        %vm311 = vcmp.eq.s32.totalorder %v278, 2
        %vm312 = vcmp.eq.s32.totalorder %v278, 3
        %v313 = vsel %vm309, %v274, 0.0
        %v314 = vsel %vm310, %v275, 0.0
        %v315 = vsel %vm311, %v276, 0.0
        %v316 = vsel %vm312, %v277, 0.0
        %v317 = vsel %vm279, %v313, 0.0
        %v318 = vsel %vm279, %v314, 0.0
        %v319 = vadd.f32 %v317, %v318
        %v320 = vsel %vm279, %v315, 0.0
        %v321 = vadd.f32 %v319, %v320
        %v322 = vsel %vm279, %v316, 0.0
        %v323 = vadd.f32 %v321, %v322
        %vm324 = vcmp.ne.s32.totalorder %v278, 4294967196
        %v325 = vld [vmem:[#allocation2] sm:$0x3]
        %v326 = vsub.f32 %v308, %v323
        %v327 = vsel %vm324, %v326, 0.0
        %v328 = vadd.f32 %v325, %v327
        %329 = vst [vmem:[#allocation2] sm:$0x3] %v328
        %v330 = vld [vmem:[#allocation3] sm:$0x3]
        %v331 = vsel %vm324, 1, 0
        %v332 = vadd.s32 %v330, %v331
        %333 = vst [vmem:[#allocation3] sm:$0x3] %v332
        // Predicated region
        $region41: #{tpu_custom_call.1} parent=27 // pred_check
          _
        $region42: #{tpu_custom_call.1} parent=27 // pred_check_branch
          %335 = sbr.rel (%p268) target = $region44
        $region43: #{tpu_custom_call.1} parent=27 // pred_region
          %v336 = vld [vmem:[#allocation2] sm:$0x3]
          %v337 = vsel %vm279, %v336, 0.0
          %338 = vadd.xlane.f32.xlu0 %v337
          %v339 = vpop.xlane.xlu0 %338
          %v340 = vrot.slane %v339, 4
          %v341 = vadd.f32 %v339, %v340
          %v342 = vrot.slane %v341, 2
          %v343 = vadd.f32 %v341, %v342
          %v344 = vrot.slane %v343, 1
          %v345 = vadd.f32 %v343, %v344
          %s346 = vtos %v345
          %v347 = vstv %s346
          %vm348 = vcmask 0
          %349 = vst.msk [vmem:[%s262] sm:$0x1] %vm348, %v347
          %v350 = vld [vmem:[#allocation3] sm:$0x3]
          %v351 = vsel %vm279, %v350, 0
          %v352 = vand.u32 %v351, 65535
          %v353 = vshrl.u32 %v351, 16
          %v354 = vcvt.s32.f32 %v352
          %v355 = vcvt.s32.f32 %v353
          %356 = vadd.xlane.f32.xlu0 %v354
          %v357 = vpop.xlane.xlu0 %356
          %358 = vadd.xlane.f32.xlu0 %v355
          %v359 = vpop.xlane.xlu0 %358
          %v360 = vcvt.f32.s32 %v357
          %v361 = vcvt.f32.s32 %v359
          %v362 = vshll.u32 %v361, 16
          %v363 = vadd.s32 %v362, %v360
          %v364 = vrot.slane %v363, 4
          %v365 = vadd.s32 %v363, %v364
          %v366 = vrot.slane %v365, 2
          %v367 = vadd.s32 %v365, %v366
          %v368 = vrot.slane %v367, 1
          %v369 = vadd.s32 %v367, %v368
          %s370 = vtos %v369
          %v371 = vstv %s370
          %372 = vst.msk [vmem:[%s265] sm:$0x1] %vm348, %v371
        $region44: #{tpu_custom_call.1} parent=27 // pred_fallthru
          _
        %p373 = scmp.lt.s32.totalorder %s26, 1
        %s374 = scalar_select %p373, %s26, 1
        %s375 = scalar_lea.vmem %s2, %s374
        %p376 = scmp.lt.s32.totalorder %s26, 1
        %s377 = scalar_select %p376, %s26, 1
        %s378 = scalar_lea.vmem %s3, %s377
        // Predicated region
        $region45: #{tpu_custom_call.1} parent=27 // pred_check
          %p379 = pneg %p118
        $region46: #{tpu_custom_call.1} parent=27 // pred_check_branch
          %381 = sbr.rel (%p379) target = $region48
        $region47: #{tpu_custom_call.1} parent=27 // pred_region
          _
        $region48: #{tpu_custom_call.1} parent=27 // pred_fallthru
          _
        // Predicated region
        $region49: #{tpu_custom_call.1} parent=27 // pred_check
          %p382 = pneg %p144
        $region50: #{tpu_custom_call.1} parent=27 // pred_check_branch
          %384 = sbr.rel (%p382) target = $region52
        $region51: #{tpu_custom_call.1} parent=27 // pred_region
          _
        $region52: #{tpu_custom_call.1} parent=27 // pred_fallthru
          _
      $region28: #{tpu_custom_call.1} parent=5 // pred_fallthru
        _
      %p385 = scmp.le.s32.totalorder 2, %s16
      // Predicated region
      $region53: #{tpu_custom_call.1} parent=5 // pred_check
        %p386 = pneg %p385
      $region54: #{tpu_custom_call.1} parent=5 // pred_check_branch
        %388 = sbr.rel (%p386) target = $region56
      $region55: #{tpu_custom_call.1} parent=5 // pred_region
        %s389 = ssub.s32 %s16, 2
        // Predicated region
        $region57: #{tpu_custom_call.1} parent=55 // pred_check
          %p390 = pneg %p124
        $region58: #{tpu_custom_call.1} parent=55 // pred_check_branch
          %392 = sbr.rel (%p390) target = $region60
        $region59: #{tpu_custom_call.1} parent=55 // pred_region
          %p393 = scmp.lt.s32.totalorder %s29, 1
          %s394 = scalar_select %p393, %s29, 1
          %s395 = scalar_lea.vmem %s2, %s394
        $region60: #{tpu_custom_call.1} parent=55 // pred_fallthru
          _
        // Predicated region
        $region61: #{tpu_custom_call.1} parent=55 // pred_check
          %p396 = pneg %p150
        $region62: #{tpu_custom_call.1} parent=55 // pred_check_branch
          %398 = sbr.rel (%p396) target = $region64
        $region63: #{tpu_custom_call.1} parent=55 // pred_region
          %p399 = scmp.lt.s32.totalorder %s29, 1
          %s400 = scalar_select %p399, %s29, 1
          %s401 = scalar_lea.vmem %s3, %s400
        $region64: #{tpu_custom_call.1} parent=55 // pred_fallthru
          _
      $region56: #{tpu_custom_call.1} parent=5 // pred_fallthru
        _
    $region6: #{tpu_custom_call.1} parent=1 // loop_footer
      %s20 = sadd.s32 1, %s16
    $region7: #{tpu_custom_call.1} parent=1 // loop_footer_branch
      %15 = sbr.rel target = $region3
    $region8: #{tpu_custom_call.1} parent=1 // loop_exit
      _
    %402 = vsyncpa [#allocation5], 1
    %s403 = scalar_lea.sflag [#allocation5], 1
    %404 = vsyncpa %s403, 1
    %405 = vsyncpa [#allocation7], 1
    %s406 = scalar_lea.sflag [#allocation7], 1
    %407 = vsyncpa %s406, 1

</llo_original>
